<compile_context>
chip_gen: v7x
topology: tpu7x:2x2x1
jax: 0.10.0
libtpu: 0.0.40
codegen_flags: <defaults>
</compile_context>

<pallas_src>
import jax
import jax.numpy as jnp
from jax.experimental import pallas as pl
from jax.experimental.pallas import tpu as pltpu


OM_TILE = 128  # one vreg lane width; tw2 is pre-broadcast to this many lanes


def _round_up(a, b):
    return (a + b - 1) // b * b


def _device_kind():
    try:
        return jax.devices()[0].device_kind.lower()
    except Exception:
        return ""


def _default_compute_dtype():
    # bf16 elementwise path only where the VPU/EUP have native bf16 (v6e / v7x);
    # keep f32 on v5e (no bf16 VPU/EUP) and anything unrecognized.
    kind = _device_kind()
    if ("v6" in kind) or ("v7" in kind) or ("tpu7" in kind) or ("7x" in kind):
        return jnp.bfloat16
    return jnp.float32


def _num_tensorcores_per_chip():
    kind = _device_kind()
    return 2 if (("v7" in kind) or ("tpu7" in kind) or ("7x" in kind)) else 1


def dnm_kernel(x_ref, w_ref, q_ref, tw2_ref, g_ref, o_ref):
    # x_ref  : (TB, D_sub, 1)      batch tile, D on sublanes (compute dtype)
    # w_ref  : (D_sub, OM_TILE)    Synapse_W chunk, branches on lanes (compute dtype)
    # q_ref  : (D_sub, OM_TILE)    Synapse_q chunk (compute dtype)
    # tw2_ref: (D_sub, OM_TILE)    tanh(Dendritic_W2), pre-broadcast across lanes (f32)
    # g_ref  : (OM_TILE, out_pad)  0/1 branch->neuron grouping chunk (f32)
    # o_ref  : (TB, out_pad)       f32 output tile, accumulated over the OM grid axis
    x = x_ref[...]                                                  # (TB, D_sub, 1)

    # Synapse layer (EUP-bound): sigmoid(x*W - Q) with OM on the lane axis.
    # Only size-1 lane / leading-dim broadcasts here (no in-kernel relayout).
    z = jax.nn.sigmoid(x * w_ref[...][None] - q_ref[...][None])     # (TB, D_sub, OM_TILE)

    # Weighted reduction over D against tanh(W2): f32 accumulate, sublane reduce.
    s = jnp.sum(z.astype(jnp.float32) * tw2_ref[...][None], axis=1)  # (TB, OM_TILE)

    # Dendritic layer: sigmoid, then sum the M branches of each output neuron
    # via a small MXU matmul with the 0/1 grouping matrix (masks OM padding).
    part = jnp.dot(jax.nn.sigmoid(s), g_ref[...],
                   preferred_element_type=jnp.float32)              # (TB, out_pad)

    @pl.when(pl.program_id(1) == 0)
    def _init():
        o_ref[...] = jnp.zeros_like(o_ref)

    o_ref[...] += part


def prepare_params(synapse_w, synapse_q, dendritic_w2, compute_dtype=None):
    """One-time preprocessing: flatten/transpose/pad weights, bake tanh(W2), build G."""
    if compute_dtype is None:
        compute_dtype = _default_compute_dtype()
    out_size, M, D = synapse_w.shape
    OM = out_size * M
    D_sub = _round_up(D, 8)               # D lives on the sublane axis
    OM_pad = _round_up(OM, OM_TILE)       # OM lives on the lane axis
    out_pad = _round_up(out_size, 128)    # lane-dense output

    f32 = jnp.float32
    # (out, M, D) -> (D, OM): branches on lanes (better lane fill than D when D < 128).
    w_t = jnp.zeros((D_sub, OM_pad), compute_dtype).at[:D, :OM].set(
        jnp.transpose(synapse_w.reshape(OM, D)).astype(compute_dtype))
    q_t = jnp.zeros((D_sub, OM_pad), compute_dtype).at[:D, :OM].set(
        jnp.transpose(synapse_q.reshape(OM, D)).astype(compute_dtype))
    # tanh(W2) baked in, pre-broadcast across OM_TILE lanes; padded D rows are 0
    # so the sigmoid(0)=0.5 terms of padded D contribute nothing.
    tw2 = jnp.zeros((D_sub, OM_TILE), f32).at[:D, :].set(
        jnp.broadcast_to(jnp.tanh(dendritic_w2.astype(f32))[:, None], (D, OM_TILE)))
    # 0/1 grouping matrix: branch om -> neuron om // M; zero rows mask OM padding.
    rows = jnp.arange(OM)
    g = jnp.zeros((OM_pad, out_pad), f32).at[rows, rows // M].set(1.0)

    return {
        "w_t": w_t, "q_t": q_t, "tw2": tw2, "g": g,
        "compute_dtype": compute_dtype,
        "dims": (D, out_size, M, OM, D_sub, OM_pad, out_pad),
    }


def dnm_forward(x, prep):
    """x: (B, input_size) -> (B, out_size); prep comes from prepare_params()."""
    D, out_size, M, OM, D_sub, OM_pad, out_pad = prep["dims"]
    cdtype = prep["compute_dtype"]
    B = x.shape[0]
    assert x.shape[1] == D

    # ---- batch-tile sizing against an explicit VMEM budget -------------------
    esize = jnp.dtype(cdtype).itemsize
    row_bytes = (D_sub * OM_TILE * (3 * esize + 8)    # rank-3 elementwise chain + f32 temp + slack
                 + D_sub * 128 * esize * 2            # x tile (lane-padded to 128), 2 buffers
                 + out_pad * 4 * 2)                   # output tile, 2 buffers
    fixed_bytes = (2 * D_sub * OM_TILE * esize * 2    # W, Q chunks (double-buffered)
                   + D_sub * OM_TILE * 4 * 2          # tw2
                   + OM_TILE * out_pad * 4 * 2        # G chunk
                   + (2 << 20))                       # misc slack
    VMEM_BUDGET = 32 * 1024 * 1024                    # headroom under the 48 MiB limit
    tb_max = (VMEM_BUDGET - fixed_bytes) // row_bytes
    tb_max = max(8, min(512, tb_max // 8 * 8))

    n_b = -(-B // tb_max)
    if _num_tensorcores_per_chip() >= 2 and B >= 16:
        n_b = max(n_b, 2)                             # keep both v7x TensorCores busy
    TB = _round_up(-(-B // n_b), 8)                   # rebalanced batch tile
    B_pad = TB * n_b
    n_om = OM_pad // OM_TILE

    # x -> (B_pad, D_sub, 1): D on sublanes, so the kernel only needs cheap
    # size-1 lane / leading-dim broadcasts.
    x3 = jnp.zeros((B_pad, D_sub, 1), cdtype).at[:B, :D, 0].set(x.astype(cdtype))

    out = pl.pallas_call(
        dnm_kernel,
        out_shape=jax.ShapeDtypeStruct((B_pad, out_pad), jnp.float32),
        grid_spec=pltpu.PrefetchScalarGridSpec(
            num_scalar_prefetch=0,
            grid=(n_b, n_om),
            in_specs=[
                pl.BlockSpec((TB, D_sub, 1), lambda i, k: (i, 0, 0)),    # x: batch-tiled
                pl.BlockSpec((D_sub, OM_TILE), lambda i, k: (0, k)),     # W: streamed over OM
                pl.BlockSpec((D_sub, OM_TILE), lambda i, k: (0, k)),     # Q: streamed over OM
                pl.BlockSpec((D_sub, OM_TILE), lambda i, k: (0, 0)),     # tanh(W2): grid-invariant
                pl.BlockSpec((OM_TILE, out_pad), lambda i, k: (k, 0)),   # G: streamed over OM
            ],
            out_specs=pl.BlockSpec((TB, out_pad), lambda i, k: (i, 0)),  # lane-dense accumulator
        ),
        compiler_params=pltpu.CompilerParams(
            dimension_semantics=("parallel", "arbitrary"),
            vmem_limit_bytes=48 * 1024 * 1024,
        ),
    )(x3, prep["w_t"], prep["q_t"], prep["tw2"], prep["g"])

    return out[:B, :out_size]


def init_params(key, input_size, out_size, M):
    # Mirrors the PyTorch __init__: W ~ U[0,1), q = 0.1 (constant_ init), W2 ~ U[0,1).
    k1, k2 = jax.random.split(key)
    synapse_w = jax.random.uniform(k1, (out_size, M, input_size), jnp.float32)
    synapse_q = jnp.full((out_size, M, input_size), 0.1, jnp.float32)
    dendritic_w2 = jax.random.uniform(k2, (input_size,), jnp.float32)
    # TODO(synk): the module's 'k' and 'qs' parameters are unused in forward(),
    # so they are not materialized here.
    return synapse_w, synapse_q, dendritic_w2


if __name__ == "__main__":
    key = jax.random.PRNGKey(0)
    kx, kp = jax.random.split(key)

    batch, input_size, out_size, M = 8, 32, 16, 5

    x = jax.random.normal(kx, (batch, input_size), jnp.float32)
    synapse_w, synapse_q, dendritic_w2 = init_params(kp, input_size, out_size, M)

    prep = prepare_params(synapse_w, synapse_q, dendritic_w2)   # one-time weight prep
    fwd = jax.jit(lambda xb: dnm_forward(xb, prep))

    out = fwd(x)
    jax.block_until_ready(out)

    # pure-JAX f32 reference (matches the PyTorch forward)
    z = jax.nn.sigmoid(x[:, None, None, :] * synapse_w[None] - synapse_q[None])
    z = z * jnp.tanh(dendritic_w2)
    ref = jnp.sum(jax.nn.sigmoid(jnp.sum(z, axis=3)), axis=2)

    assert out.shape == (batch, out_size)
    tol = 1e-4 if prep["compute_dtype"] == jnp.float32 else 5e-2
    assert jnp.allclose(out, ref, atol=tol, rtol=tol), "mismatch vs reference"

    print("KERNEL_OK")
</pallas_src>

<mosaic_0001>
module attributes {stable_mosaic.version = 11 : i64} {
  func.func @dnm_kernel(%arg0: i32, %arg1: i32, %arg2: memref<8x32x1xf32, #tpu.memory_space<vmem>>, %arg3: memref<32x128xf32, #tpu.memory_space<vmem>>, %arg4: memref<32x128xf32, #tpu.memory_space<vmem>>, %arg5: memref<32x128xf32, #tpu.memory_space<vmem>>, %arg6: memref<128x128xf32, #tpu.memory_space<vmem>>, %arg7: memref<8x128xf32, #tpu.memory_space<vmem>>) attributes {dimension_semantics = [#tpu.dimension_semantics<parallel>, #tpu.dimension_semantics<arbitrary>], iteration_bounds = array<i64: 1, 1>, scalar_prefetch = 0 : i64, scratch_operands = 0 : i64, tpu.core_type = #tpu.core_type<tc>, window_params = [{transform_indices = @transform_0, window_bounds = array<i64: 8, 32, 1>}, {transform_indices = @transform_1, window_bounds = array<i64: 32, 128>}, {transform_indices = @transform_2, window_bounds = array<i64: 32, 128>}, {pipeline_mode = #tpu.pipeline_mode<synchronous>, transform_indices = @transform_3, window_bounds = array<i64: 32, 128>}, {transform_indices = @transform_4, window_bounds = array<i64: 128, 128>}, {transform_indices = @transform_5, window_bounds = array<i64: 8, 128>}]} {
    %c0 = arith.constant 0 : index
    %c0_0 = arith.constant 0 : index
    %c0_1 = arith.constant 0 : index
    %0 = vector.load %arg2[%c0, %c0_0, %c0_1] : memref<8x32x1xf32, #tpu.memory_space<vmem>>, vector<8x32x1xf32>
    %c0_2 = arith.constant 0 : index
    %c0_3 = arith.constant 0 : index
    %1 = vector.load %arg3[%c0_2, %c0_3] : memref<32x128xf32, #tpu.memory_space<vmem>>, vector<32x128xf32>
    %2 = vector.shape_cast %1 : vector<32x128xf32> to vector<1x32x128xf32>
    %3 = vector.broadcast %0 : vector<8x32x1xf32> to vector<8x32x128xf32>
    %4 = vector.broadcast %2 : vector<1x32x128xf32> to vector<8x32x128xf32>
    %5 = arith.mulf %3, %4 : vector<8x32x128xf32>
    %c0_4 = arith.constant 0 : index
    %c0_5 = arith.constant 0 : index
    %6 = vector.load %arg4[%c0_4, %c0_5] : memref<32x128xf32, #tpu.memory_space<vmem>>, vector<32x128xf32>
    %7 = vector.shape_cast %6 : vector<32x128xf32> to vector<1x32x128xf32>
    %8 = vector.broadcast %7 : vector<1x32x128xf32> to vector<8x32x128xf32>
    %9 = arith.subf %5, %8 : vector<8x32x128xf32>
    %10 = arith.negf %9 : vector<8x32x128xf32>
    %11 = math.exp %10 : vector<8x32x128xf32>
    %cst = arith.constant 1.000000e+00 : f32
    %12 = vector.broadcast %cst : f32 to vector<8x32x128xf32>
    %13 = arith.addf %12, %11 : vector<8x32x128xf32>
    %14 = arith.divf %12, %13 : vector<8x32x128xf32>
    %c0_6 = arith.constant 0 : index
    %c0_7 = arith.constant 0 : index
    %15 = vector.load %arg5[%c0_6, %c0_7] : memref<32x128xf32, #tpu.memory_space<vmem>>, vector<32x128xf32>
    %16 = vector.shape_cast %15 : vector<32x128xf32> to vector<1x32x128xf32>
    %17 = vector.broadcast %16 : vector<1x32x128xf32> to vector<8x32x128xf32>
    %18 = arith.mulf %14, %17 : vector<8x32x128xf32>
    %cst_8 = arith.constant dense<0.000000e+00> : vector<8x128xf32>
    %19 = vector.multi_reduction <add>, %18, %cst_8 [1] : vector<8x32x128xf32> to vector<8x128xf32>
    %20 = arith.negf %19 : vector<8x128xf32>
    %21 = math.exp %20 : vector<8x128xf32>
    %cst_9 = arith.constant 1.000000e+00 : f32
    %22 = vector.broadcast %cst_9 : f32 to vector<8x128xf32>
    %23 = arith.addf %22, %21 : vector<8x128xf32>
    %24 = arith.divf %22, %23 : vector<8x128xf32>
    %c0_10 = arith.constant 0 : index
    %c0_11 = arith.constant 0 : index
    %25 = vector.load %arg6[%c0_10, %c0_11] : memref<128x128xf32, #tpu.memory_space<vmem>>, vector<128x128xf32>
    %cst_12 = arith.constant dense<0.000000e+00> : vector<8x128xf32>
    %26 = tpu.matmul %24, %25, %cst_12 {dimension_numbers = #tpu.dot_dimension_numbers<[1], [0], [0], [1], [0, 0, 1, 1], [], []>} : vector<8x128xf32>, vector<128x128xf32>, vector<8x128xf32> -> vector<8x128xf32>
    %c0_i32 = arith.constant 0 : i32
    %27 = arith.cmpi eq, %arg1, %c0_i32 : i32
    %28 = arith.extui %27 : i1 to i32
    %c0_i32_13 = arith.constant 0 : i32
    %29 = arith.cmpi ne, %28, %c0_i32_13 : i32
    scf.if %29 {
      %cst_18 = arith.constant 0.000000e+00 : f32
      %33 = vector.broadcast %cst_18 : f32 to vector<8x128xf32>
      %c0_19 = arith.constant 0 : index
      %c0_20 = arith.constant 0 : index
      %34 = vector.load %arg7[%c0_19, %c0_20] : memref<8x128xf32, #tpu.memory_space<vmem>>, vector<8x128xf32>
      tpu.vector_store %arg7[%c0_19, %c0_20], %33 {strides = array<i32>} : memref<8x128xf32, #tpu.memory_space<vmem>>, vector<8x128xf32>,
    } else {
    }
    %c0_14 = arith.constant 0 : index
    %c0_15 = arith.constant 0 : index
    %30 = vector.load %arg7[%c0_14, %c0_15] : memref<8x128xf32, #tpu.memory_space<vmem>>, vector<8x128xf32>
    %31 = arith.addf %30, %26 : vector<8x128xf32>
    %c0_16 = arith.constant 0 : index
    %c0_17 = arith.constant 0 : index
    %32 = vector.load %arg7[%c0_16, %c0_17] : memref<8x128xf32, #tpu.memory_space<vmem>>, vector<8x128xf32>
    tpu.vector_store %arg7[%c0_16, %c0_17], %31 {strides = array<i32>} : memref<8x128xf32, #tpu.memory_space<vmem>>, vector<8x128xf32>,
    return
  }
  func.func @transform_0(%arg0: i32, %arg1: i32) -> (i32, i32, i32) {
    %c0_i32 = arith.constant 0 : i32
    %c0_i32_0 = arith.constant 0 : i32
    %c0_i32_1 = arith.constant 0 : i32
    return %arg0, %c0_i32, %c0_i32_0 : i32, i32, i32
  }
  func.func @transform_1(%arg0: i32, %arg1: i32) -> (i32, i32) {
    %c0_i32 = arith.constant 0 : i32
    %c0_i32_0 = arith.constant 0 : i32
    return %c0_i32, %arg1 : i32, i32
  }
  func.func @transform_2(%arg0: i32, %arg1: i32) -> (i32, i32) {
    %c0_i32 = arith.constant 0 : i32
    %c0_i32_0 = arith.constant 0 : i32
    return %c0_i32, %arg1 : i32, i32
  }
  func.func @transform_3(%arg0: i32, %arg1: i32) -> (i32, i32) {
    %c0_i32 = arith.constant 0 : i32
    %c0_i32_0 = arith.constant 0 : i32
    %c0_i32_1 = arith.constant 0 : i32
    return %c0_i32, %c0_i32_0 : i32, i32
  }
  func.func @transform_4(%arg0: i32, %arg1: i32) -> (i32, i32) {
    %c0_i32 = arith.constant 0 : i32
    %c0_i32_0 = arith.constant 0 : i32
    return %arg1, %c0_i32 : i32, i32
  }
  func.func @transform_5(%arg0: i32, %arg1: i32) -> (i32, i32) {
    %c0_i32 = arith.constant 0 : i32
    %c0_i32_0 = arith.constant 0 : i32
    return %arg0, %c0_i32 : i32, i32
  }
}

</mosaic_0001>

<llo_original>
// kernel: _lambda_.1
$region0: #{_lambda_.1}
  #allocation0 [shape = 'u32[]', space=smem, size = 0x4, offset = 0x4, fixed_abs, tag = 'smem constant byte address 0x4 - core index']
  #allocation1 [shape = 'u32[144,128]{1,0:T(1,128)}', space=vmem, size = 0x12000, scoped, tag = 'internal scratch']
  %s0 = inlined_call_operand.vmem [shape: f32[8,32,1], index: 0, kind: input, shape index: {}]
  %s1 = inlined_call_operand.vmem [shape: f32[32,128], index: 1, kind: input, shape index: {}]
  %s2 = inlined_call_operand.vmem [shape: f32[32,128], index: 2, kind: input, shape index: {}]
  %s3 = inlined_call_operand.vmem [shape: f32[32,128], index: 3, kind: input, shape index: {}]
  %s4 = inlined_call_operand.vmem [shape: f32[128,128], index: 4, kind: input, shape index: {}]
  %s5 = inlined_call_operand.hbm [shape: f32[8,128], index: 5, kind: output, shape index: {}]
  %s6 = sld [smem:[#allocation0]]
  $region34: #{_lambda_.1} parent=0
    _
  %s8 = ssub.s32 1, %s6
  %s9 = scalar_select 0, %s8, %s6
  $region1: #{_lambda_.1} parent=0
    #allocation2 [shape = 'u8[4096]{0}', space=vmem, size = 0x1000, scoped, tag = 'output window, operand 0, single buffered']
    #allocation3 [shape = 's32[1]{0}', space=sflag, size = 0x4, scoped, tag = 'scoped memory for _lambda_.1']
    %10 = vsyncpa [#allocation3], 0
    // Predicated region
    $region2: #{_lambda_.1} parent=1 // pred_check
      _
    $region3: #{_lambda_.1} parent=1 // pred_check_branch
      %12 = sbr.rel (0) target = $region5
    $region4: #{_lambda_.1} parent=1 // pred_region
      _
    $region5: #{_lambda_.1} parent=1 // pred_fallthru
      _
    // Predicated region
    $region6: #{_lambda_.1} parent=1 // pred_check
      _
    $region7: #{_lambda_.1} parent=1 // pred_check_branch
      %14 = sbr.rel (0) target = $region9
    $region8: #{_lambda_.1} parent=1 // pred_region
      _
    $region9: #{_lambda_.1} parent=1 // pred_fallthru
      _
    // Predicated region
    $region10: #{_lambda_.1} parent=1 // pred_check
      _
    $region11: #{_lambda_.1} parent=1 // pred_check_branch
      %16 = sbr.rel (0) target = $region13
    $region12: #{_lambda_.1} parent=1 // pred_region
      _
    $region13: #{_lambda_.1} parent=1 // pred_fallthru
      _
    // Predicated region
    $region14: #{_lambda_.1} parent=1 // pred_check
      _
    $region15: #{_lambda_.1} parent=1 // pred_check_branch
      %18 = sbr.rel (0) target = $region17
    $region16: #{_lambda_.1} parent=1 // pred_region
      _
    $region17: #{_lambda_.1} parent=1 // pred_fallthru
      _
    // Predicated region
    $region18: #{_lambda_.1} parent=1 // pred_check
      _
    $region19: #{_lambda_.1} parent=1 // pred_check_branch
      %20 = sbr.rel (0) target = $region21
    $region20: #{_lambda_.1} parent=1 // pred_region
      _
    $region21: #{_lambda_.1} parent=1 // pred_fallthru
      _
    %v21 = vld [vmem:[%s0] sm:$0xff]
    %v22 = vld [vmem:[%s0 + $0x8] sm:$0xff]
    %v23 = vld [vmem:[%s0 + $0x10] sm:$0xff]
    %v24 = vld [vmem:[%s0 + $0x18] sm:$0xff]
    %v25 = vld [vmem:[%s0 + $0x20] sm:$0xff]
    %v26 = vld [vmem:[%s0 + $0x28] sm:$0xff]
    %v27 = vld [vmem:[%s0 + $0x30] sm:$0xff]
    %v28 = vld [vmem:[%s0 + $0x38] sm:$0xff]
    %v29 = vld [vmem:[%s0 + $0x40] sm:$0xff]
    %v30 = vld [vmem:[%s0 + $0x48] sm:$0xff]
    %v31 = vld [vmem:[%s0 + $0x50] sm:$0xff]
    %v32 = vld [vmem:[%s0 + $0x58] sm:$0xff]
    %v33 = vld [vmem:[%s0 + $0x60] sm:$0xff]
    %v34 = vld [vmem:[%s0 + $0x68] sm:$0xff]
    %v35 = vld [vmem:[%s0 + $0x70] sm:$0xff]
    %v36 = vld [vmem:[%s0 + $0x78] sm:$0xff]
    %v37 = vld [vmem:[%s0 + $0x80] sm:$0xff]
    %v38 = vld [vmem:[%s0 + $0x88] sm:$0xff]
    %v39 = vld [vmem:[%s0 + $0x90] sm:$0xff]
    %v40 = vld [vmem:[%s0 + $0x98] sm:$0xff]
    %v41 = vld [vmem:[%s0 + $0xa0] sm:$0xff]
    %v42 = vld [vmem:[%s0 + $0xa8] sm:$0xff]
    %v43 = vld [vmem:[%s0 + $0xb0] sm:$0xff]
    %v44 = vld [vmem:[%s0 + $0xb8] sm:$0xff]
    %v45 = vld [vmem:[%s0 + $0xc0] sm:$0xff]
    %v46 = vld [vmem:[%s0 + $0xc8] sm:$0xff]
    %v47 = vld [vmem:[%s0 + $0xd0] sm:$0xff]
    %v48 = vld [vmem:[%s0 + $0xd8] sm:$0xff]
    %v49 = vld [vmem:[%s0 + $0xe0] sm:$0xff]
    %v50 = vld [vmem:[%s0 + $0xe8] sm:$0xff]
    %v51 = vld [vmem:[%s0 + $0xf0] sm:$0xff]
    %v52 = vld [vmem:[%s0 + $0xf8] sm:$0xff]
    %v53 = vld [vmem:[%s1] sm:$0xff]
    %v54 = vld [vmem:[%s1 + $0x8] sm:$0xff]
    %v55 = vld [vmem:[%s1 + $0x10] sm:$0xff]
    %v56 = vld [vmem:[%s1 + $0x18] sm:$0xff]
    %58 = vset.pattern.permute.xlu0 0
    %59 = vperm.xlu0 %58, %v21
    %v60 = vpop.permute.xlu0 %59
    %63 = vset.pattern.permute.xlu0 0
    %64 = vperm.xlu0 %63, %v22
    %v65 = vpop.permute.xlu0 %64
    %68 = vset.pattern.permute.xlu0 0
    %69 = vperm.xlu0 %68, %v23
    %v70 = vpop.permute.xlu0 %69
    %73 = vset.pattern.permute.xlu0 0
    %74 = vperm.xlu0 %73, %v24
    %v75 = vpop.permute.xlu0 %74
    %78 = vset.pattern.permute.xlu0 0
    %79 = vperm.xlu0 %78, %v25
    %v80 = vpop.permute.xlu0 %79
    %83 = vset.pattern.permute.xlu0 0
    %84 = vperm.xlu0 %83, %v26
    %v85 = vpop.permute.xlu0 %84
    %88 = vset.pattern.permute.xlu0 0
    %89 = vperm.xlu0 %88, %v27
    %v90 = vpop.permute.xlu0 %89
    %93 = vset.pattern.permute.xlu0 0
    %94 = vperm.xlu0 %93, %v28
    %v95 = vpop.permute.xlu0 %94
    %98 = vset.pattern.permute.xlu0 0
    %99 = vperm.xlu0 %98, %v29
    %v100 = vpop.permute.xlu0 %99
    %103 = vset.pattern.permute.xlu0 0
    %104 = vperm.xlu0 %103, %v30
    %v105 = vpop.permute.xlu0 %104
    %108 = vset.pattern.permute.xlu0 0
    %109 = vperm.xlu0 %108, %v31
    %v110 = vpop.permute.xlu0 %109
    %113 = vset.pattern.permute.xlu0 0
    %114 = vperm.xlu0 %113, %v32
    %v115 = vpop.permute.xlu0 %114
    %118 = vset.pattern.permute.xlu0 0
    %119 = vperm.xlu0 %118, %v33
    %v120 = vpop.permute.xlu0 %119
    %123 = vset.pattern.permute.xlu0 0
    %124 = vperm.xlu0 %123, %v34
    %v125 = vpop.permute.xlu0 %124
    %128 = vset.pattern.permute.xlu0 0
    %129 = vperm.xlu0 %128, %v35
    %v130 = vpop.permute.xlu0 %129
    %133 = vset.pattern.permute.xlu0 0
    %134 = vperm.xlu0 %133, %v36
    %v135 = vpop.permute.xlu0 %134
    %138 = vset.pattern.permute.xlu0 0
    %139 = vperm.xlu0 %138, %v37
    %v140 = vpop.permute.xlu0 %139
    %143 = vset.pattern.permute.xlu0 0
    %144 = vperm.xlu0 %143, %v38
    %v145 = vpop.permute.xlu0 %144
    %148 = vset.pattern.permute.xlu0 0
    %149 = vperm.xlu0 %148, %v39
    %v150 = vpop.permute.xlu0 %149
    %153 = vset.pattern.permute.xlu0 0
    %154 = vperm.xlu0 %153, %v40
    %v155 = vpop.permute.xlu0 %154
    %158 = vset.pattern.permute.xlu0 0
    %159 = vperm.xlu0 %158, %v41
    %v160 = vpop.permute.xlu0 %159
    %163 = vset.pattern.permute.xlu0 0
    %164 = vperm.xlu0 %163, %v42
    %v165 = vpop.permute.xlu0 %164
    %168 = vset.pattern.permute.xlu0 0
    %169 = vperm.xlu0 %168, %v43
    %v170 = vpop.permute.xlu0 %169
    %173 = vset.pattern.permute.xlu0 0
    %174 = vperm.xlu0 %173, %v44
    %v175 = vpop.permute.xlu0 %174
    %178 = vset.pattern.permute.xlu0 0
    %179 = vperm.xlu0 %178, %v45
    %v180 = vpop.permute.xlu0 %179
    %183 = vset.pattern.permute.xlu0 0
    %184 = vperm.xlu0 %183, %v46
    %v185 = vpop.permute.xlu0 %184
    %188 = vset.pattern.permute.xlu0 0
    %189 = vperm.xlu0 %188, %v47
    %v190 = vpop.permute.xlu0 %189
    %193 = vset.pattern.permute.xlu0 0
    %194 = vperm.xlu0 %193, %v48
    %v195 = vpop.permute.xlu0 %194
    %198 = vset.pattern.permute.xlu0 0
    %199 = vperm.xlu0 %198, %v49
    %v200 = vpop.permute.xlu0 %199
    %203 = vset.pattern.permute.xlu0 0
    %204 = vperm.xlu0 %203, %v50
    %v205 = vpop.permute.xlu0 %204
    %208 = vset.pattern.permute.xlu0 0
    %209 = vperm.xlu0 %208, %v51
    %v210 = vpop.permute.xlu0 %209
    %213 = vset.pattern.permute.xlu0 0
    %214 = vperm.xlu0 %213, %v52
    %v215 = vpop.permute.xlu0 %214
    %v217 = vmul.f32 %v60, %v53
    %v218 = vmul.f32 %v65, %v54
    %v219 = vmul.f32 %v70, %v55
    %v220 = vmul.f32 %v75, %v56
    %v221 = vmul.f32 %v80, %v53
    %v222 = vmul.f32 %v85, %v54
    %v223 = vmul.f32 %v90, %v55
    %v224 = vmul.f32 %v95, %v56
    %v225 = vmul.f32 %v100, %v53
    %v226 = vmul.f32 %v105, %v54
    %v227 = vmul.f32 %v110, %v55
    %v228 = vmul.f32 %v115, %v56
    %v229 = vmul.f32 %v120, %v53
    %v230 = vmul.f32 %v125, %v54
    %v231 = vmul.f32 %v130, %v55
    %v232 = vmul.f32 %v135, %v56
    %v233 = vmul.f32 %v140, %v53
    %v234 = vmul.f32 %v145, %v54
    %v235 = vmul.f32 %v150, %v55
    %v236 = vmul.f32 %v155, %v56
    %v237 = vmul.f32 %v160, %v53
    %v238 = vmul.f32 %v165, %v54
    %v239 = vmul.f32 %v170, %v55
    %v240 = vmul.f32 %v175, %v56
    %v241 = vmul.f32 %v180, %v53
    %v242 = vmul.f32 %v185, %v54
    %v243 = vmul.f32 %v190, %v55
    %v244 = vmul.f32 %v195, %v56
    %v245 = vmul.f32 %v200, %v53
    %v246 = vmul.f32 %v205, %v54
    %v247 = vmul.f32 %v210, %v55
    %v248 = vmul.f32 %v215, %v56
    %v249 = vld [vmem:[%s2] sm:$0xff]
    %v250 = vld [vmem:[%s2 + $0x8] sm:$0xff]
    %v251 = vld [vmem:[%s2 + $0x10] sm:$0xff]
    %v252 = vld [vmem:[%s2 + $0x18] sm:$0xff]
    %v253 = vsub.f32 %v217, %v249
    %v254 = vsub.f32 %v218, %v250
    %v255 = vsub.f32 %v219, %v251
    %v256 = vsub.f32 %v220, %v252
    %v257 = vsub.f32 %v221, %v249
    %v258 = vsub.f32 %v222, %v250
    %v259 = vsub.f32 %v223, %v251
    %v260 = vsub.f32 %v224, %v252
    %v261 = vsub.f32 %v225, %v249
    %v262 = vsub.f32 %v226, %v250
    %v263 = vsub.f32 %v227, %v251
    %v264 = vsub.f32 %v228, %v252
    %v265 = vsub.f32 %v229, %v249
    %v266 = vsub.f32 %v230, %v250
    %v267 = vsub.f32 %v231, %v251
    %v268 = vsub.f32 %v232, %v252
    %v269 = vsub.f32 %v233, %v249
    %v270 = vsub.f32 %v234, %v250
    %v271 = vsub.f32 %v235, %v251
    %v272 = vsub.f32 %v236, %v252
    %v273 = vsub.f32 %v237, %v249
    %v274 = vsub.f32 %v238, %v250
    %v275 = vsub.f32 %v239, %v251
    %v276 = vsub.f32 %v240, %v252
    %v277 = vsub.f32 %v241, %v249
    %v278 = vsub.f32 %v242, %v250
    %v279 = vsub.f32 %v243, %v251
    %v280 = vsub.f32 %v244, %v252
    %v281 = vsub.f32 %v245, %v249
    %v282 = vsub.f32 %v246, %v250
    %v283 = vsub.f32 %v247, %v251
    %v284 = vsub.f32 %v248, %v252
    %v285 = vxor.u32 %v253, 2147483648
    %v286 = vxor.u32 %v254, 2147483648
    %v287 = vxor.u32 %v255, 2147483648
    %v288 = vxor.u32 %v256, 2147483648
    %v289 = vxor.u32 %v257, 2147483648
    %v290 = vxor.u32 %v258, 2147483648
    %v291 = vxor.u32 %v259, 2147483648
    %v292 = vxor.u32 %v260, 2147483648
    %v293 = vxor.u32 %v261, 2147483648
    %v294 = vxor.u32 %v262, 2147483648
    %v295 = vxor.u32 %v263, 2147483648
    %v296 = vxor.u32 %v264, 2147483648
    %v297 = vxor.u32 %v265, 2147483648
    %v298 = vxor.u32 %v266, 2147483648
    %v299 = vxor.u32 %v267, 2147483648
    %v300 = vxor.u32 %v268, 2147483648
    %v301 = vxor.u32 %v269, 2147483648
    %v302 = vxor.u32 %v270, 2147483648
    %v303 = vxor.u32 %v271, 2147483648
    %v304 = vxor.u32 %v272, 2147483648
    %v305 = vxor.u32 %v273, 2147483648
    %v306 = vxor.u32 %v274, 2147483648
    %v307 = vxor.u32 %v275, 2147483648
    %v308 = vxor.u32 %v276, 2147483648
    %v309 = vxor.u32 %v277, 2147483648
    %v310 = vxor.u32 %v278, 2147483648
    %v311 = vxor.u32 %v279, 2147483648
    %v312 = vxor.u32 %v280, 2147483648
    %v313 = vxor.u32 %v281, 2147483648
    %v314 = vxor.u32 %v282, 2147483648
    %v315 = vxor.u32 %v283, 2147483648
    %v316 = vxor.u32 %v284, 2147483648
    %v317 = vmul.f32 %v285, 1.442695
    %v318 = vpow.pop %v317
    %v319 = vmul.f32 %v286, 1.442695
    %v320 = vpow.pop %v319
    %v321 = vmul.f32 %v287, 1.442695
    %v322 = vpow.pop %v321
    %v323 = vmul.f32 %v288, 1.442695
    %v324 = vpow.pop %v323
    %v325 = vmul.f32 %v289, 1.442695
    %v326 = vpow.pop %v325
    %v327 = vmul.f32 %v290, 1.442695
    %v328 = vpow.pop %v327
    %v329 = vmul.f32 %v291, 1.442695
    %v330 = vpow.pop %v329
    %v331 = vmul.f32 %v292, 1.442695
    %v332 = vpow.pop %v331
    %v333 = vmul.f32 %v293, 1.442695
    %v334 = vpow.pop %v333
    %v335 = vmul.f32 %v294, 1.442695
    %v336 = vpow.pop %v335
    %v337 = vmul.f32 %v295, 1.442695
    %v338 = vpow.pop %v337
    %v339 = vmul.f32 %v296, 1.442695
    %v340 = vpow.pop %v339
    %v341 = vmul.f32 %v297, 1.442695
    %v342 = vpow.pop %v341
    %v343 = vmul.f32 %v298, 1.442695
    %v344 = vpow.pop %v343
    %v345 = vmul.f32 %v299, 1.442695
    %v346 = vpow.pop %v345
    %v347 = vmul.f32 %v300, 1.442695
    %v348 = vpow.pop %v347
    %v349 = vmul.f32 %v301, 1.442695
    %v350 = vpow.pop %v349
    %v351 = vmul.f32 %v302, 1.442695
    %v352 = vpow.pop %v351
    %v353 = vmul.f32 %v303, 1.442695
    %v354 = vpow.pop %v353
    %v355 = vmul.f32 %v304, 1.442695
    %v356 = vpow.pop %v355
    %v357 = vmul.f32 %v305, 1.442695
    %v358 = vpow.pop %v357
    %v359 = vmul.f32 %v306, 1.442695
    %v360 = vpow.pop %v359
    %v361 = vmul.f32 %v307, 1.442695
    %v362 = vpow.pop %v361
    %v363 = vmul.f32 %v308, 1.442695
    %v364 = vpow.pop %v363
    %v365 = vmul.f32 %v309, 1.442695
    %v366 = vpow.pop %v365
    %v367 = vmul.f32 %v310, 1.442695
    %v368 = vpow.pop %v367
    %v369 = vmul.f32 %v311, 1.442695
    %v370 = vpow.pop %v369
    %v371 = vmul.f32 %v312, 1.442695
    %v372 = vpow.pop %v371
    %v373 = vmul.f32 %v313, 1.442695
    %v374 = vpow.pop %v373
    %v375 = vmul.f32 %v314, 1.442695
    %v376 = vpow.pop %v375
    %v377 = vmul.f32 %v315, 1.442695
    %v378 = vpow.pop %v377
    %v379 = vmul.f32 %v316, 1.442695
    %v380 = vpow.pop %v379
    %v381 = vadd.f32 %v318, 1.0
    %v382 = vadd.f32 %v320, 1.0
    %v383 = vadd.f32 %v322, 1.0
    %v384 = vadd.f32 %v324, 1.0
    %v385 = vadd.f32 %v326, 1.0
    %v386 = vadd.f32 %v328, 1.0
    %v387 = vadd.f32 %v330, 1.0
    %v388 = vadd.f32 %v332, 1.0
    %v389 = vadd.f32 %v334, 1.0
    %v390 = vadd.f32 %v336, 1.0
    %v391 = vadd.f32 %v338, 1.0
    %v392 = vadd.f32 %v340, 1.0
    %v393 = vadd.f32 %v342, 1.0
    %v394 = vadd.f32 %v344, 1.0
    %v395 = vadd.f32 %v346, 1.0
    %v396 = vadd.f32 %v348, 1.0
    %v397 = vadd.f32 %v350, 1.0
    %v398 = vadd.f32 %v352, 1.0
    %v399 = vadd.f32 %v354, 1.0
    %v400 = vadd.f32 %v356, 1.0
    %v401 = vadd.f32 %v358, 1.0
    %v402 = vadd.f32 %v360, 1.0
    %v403 = vadd.f32 %v362, 1.0
    %v404 = vadd.f32 %v364, 1.0
    %v405 = vadd.f32 %v366, 1.0
    %v406 = vadd.f32 %v368, 1.0
    %v407 = vadd.f32 %v370, 1.0
    %v408 = vadd.f32 %v372, 1.0
    %v409 = vadd.f32 %v374, 1.0
    %v410 = vadd.f32 %v376, 1.0
    %v411 = vadd.f32 %v378, 1.0
    %v412 = vadd.f32 %v380, 1.0
    %v413 = vrcp.pop %v381
    %v414 = vmul.f32 1.0, %v413
    %v415 = vrcp.pop %v382
    %v416 = vmul.f32 1.0, %v415
    %v417 = vrcp.pop %v383
    %v418 = vmul.f32 1.0, %v417
    %v419 = vrcp.pop %v384
    %v420 = vmul.f32 1.0, %v419
    %v421 = vrcp.pop %v385
    %v422 = vmul.f32 1.0, %v421
    %v423 = vrcp.pop %v386
    %v424 = vmul.f32 1.0, %v423
    %v425 = vrcp.pop %v387
    %v426 = vmul.f32 1.0, %v425
    %v427 = vrcp.pop %v388
    %v428 = vmul.f32 1.0, %v427
    %v429 = vrcp.pop %v389
    %v430 = vmul.f32 1.0, %v429
    %v431 = vrcp.pop %v390
    %v432 = vmul.f32 1.0, %v431
    %v433 = vrcp.pop %v391
    %v434 = vmul.f32 1.0, %v433
    %v435 = vrcp.pop %v392
    %v436 = vmul.f32 1.0, %v435
    %v437 = vrcp.pop %v393
    %v438 = vmul.f32 1.0, %v437
    %v439 = vrcp.pop %v394
    %v440 = vmul.f32 1.0, %v439
    %v441 = vrcp.pop %v395
    %v442 = vmul.f32 1.0, %v441
    %v443 = vrcp.pop %v396
    %v444 = vmul.f32 1.0, %v443
    %v445 = vrcp.pop %v397
    %v446 = vmul.f32 1.0, %v445
    %v447 = vrcp.pop %v398
    %v448 = vmul.f32 1.0, %v447
    %v449 = vrcp.pop %v399
    %v450 = vmul.f32 1.0, %v449
    %v451 = vrcp.pop %v400
    %v452 = vmul.f32 1.0, %v451
    %v453 = vrcp.pop %v401
    %v454 = vmul.f32 1.0, %v453
    %v455 = vrcp.pop %v402
    %v456 = vmul.f32 1.0, %v455
    %v457 = vrcp.pop %v403
    %v458 = vmul.f32 1.0, %v457
    %v459 = vrcp.pop %v404
    %v460 = vmul.f32 1.0, %v459
    %v461 = vrcp.pop %v405
    %v462 = vmul.f32 1.0, %v461
    %v463 = vrcp.pop %v406
    %v464 = vmul.f32 1.0, %v463
    %v465 = vrcp.pop %v407
    %v466 = vmul.f32 1.0, %v465
    %v467 = vrcp.pop %v408
    %v468 = vmul.f32 1.0, %v467
    %v469 = vrcp.pop %v409
    %v470 = vmul.f32 1.0, %v469
    %v471 = vrcp.pop %v410
    %v472 = vmul.f32 1.0, %v471
    %v473 = vrcp.pop %v411
    %v474 = vmul.f32 1.0, %v473
    %v475 = vrcp.pop %v412
    %v476 = vmul.f32 1.0, %v475
    %v477 = vld [vmem:[%s3] sm:$0xff]
    %v478 = vld [vmem:[%s3 + $0x8] sm:$0xff]
    %v479 = vld [vmem:[%s3 + $0x10] sm:$0xff]
    %v480 = vld [vmem:[%s3 + $0x18] sm:$0xff]
    %v481 = vmul.f32 %v414, %v477
    %v482 = vmul.f32 %v416, %v478
    %v483 = vmul.f32 %v418, %v479
    %v484 = vmul.f32 %v420, %v480
    %v485 = vmul.f32 %v422, %v477
    %v486 = vmul.f32 %v424, %v478
    %v487 = vmul.f32 %v426, %v479
    %v488 = vmul.f32 %v428, %v480
    %v489 = vmul.f32 %v430, %v477
    %v490 = vmul.f32 %v432, %v478
    %v491 = vmul.f32 %v434, %v479
    %v492 = vmul.f32 %v436, %v480
    %v493 = vmul.f32 %v438, %v477
    %v494 = vmul.f32 %v440, %v478
    %v495 = vmul.f32 %v442, %v479
    %v496 = vmul.f32 %v444, %v480
    %v497 = vmul.f32 %v446, %v477
    %v498 = vmul.f32 %v448, %v478
    %v499 = vmul.f32 %v450, %v479
    %v500 = vmul.f32 %v452, %v480
    %v501 = vmul.f32 %v454, %v477
    %v502 = vmul.f32 %v456, %v478
    %v503 = vmul.f32 %v458, %v479
    %v504 = vmul.f32 %v460, %v480
    %v505 = vmul.f32 %v462, %v477
    %v506 = vmul.f32 %v464, %v478
    %v507 = vmul.f32 %v466, %v479
    %v508 = vmul.f32 %v468, %v480
    %v509 = vmul.f32 %v470, %v477
    %v510 = vmul.f32 %v472, %v478
    %v511 = vmul.f32 %v474, %v479
    %v512 = vmul.f32 %v476, %v480
    %v513 = vadd.f32 %v481, %v482
    %v514 = vadd.f32 %v513, %v483
    %v515 = vadd.f32 %v514, %v484
    %v516 = vrot.slane %v515, 4
    %v517 = vadd.f32 %v515, %v516
    %v518 = vrot.slane %v517, 2
    %v519 = vadd.f32 %v517, %v518
    %v520 = vrot.slane %v519, 1
    %v521 = vadd.f32 %v519, %v520
    %v522 = vadd.f32 %v485, %v486
    %v523 = vadd.f32 %v522, %v487
    %v524 = vadd.f32 %v523, %v488
    %v525 = vrot.slane %v524, 4
    %v526 = vadd.f32 %v524, %v525
    %v527 = vrot.slane %v526, 2
    %v528 = vadd.f32 %v526, %v527
    %v529 = vrot.slane %v528, 1
    %v530 = vadd.f32 %v528, %v529
    %v531 = vadd.f32 %v489, %v490
    %v532 = vadd.f32 %v531, %v491
    %v533 = vadd.f32 %v532, %v492
    %v534 = vrot.slane %v533, 4
    %v535 = vadd.f32 %v533, %v534
    %v536 = vrot.slane %v535, 2
    %v537 = vadd.f32 %v535, %v536
    %v538 = vrot.slane %v537, 1
    %v539 = vadd.f32 %v537, %v538
    %v540 = vadd.f32 %v493, %v494
    %v541 = vadd.f32 %v540, %v495
    %v542 = vadd.f32 %v541, %v496
    %v543 = vrot.slane %v542, 4
    %v544 = vadd.f32 %v542, %v543
    %v545 = vrot.slane %v544, 2
    %v546 = vadd.f32 %v544, %v545
    %v547 = vrot.slane %v546, 1
    %v548 = vadd.f32 %v546, %v547
    %v549 = vadd.f32 %v497, %v498
    %v550 = vadd.f32 %v549, %v499
    %v551 = vadd.f32 %v550, %v500
    %v552 = vrot.slane %v551, 4
    %v553 = vadd.f32 %v551, %v552
    %v554 = vrot.slane %v553, 2
    %v555 = vadd.f32 %v553, %v554
    %v556 = vrot.slane %v555, 1
    %v557 = vadd.f32 %v555, %v556
    %v558 = vadd.f32 %v501, %v502
    %v559 = vadd.f32 %v558, %v503
    %v560 = vadd.f32 %v559, %v504
    %v561 = vrot.slane %v560, 4
    %v562 = vadd.f32 %v560, %v561
    %v563 = vrot.slane %v562, 2
    %v564 = vadd.f32 %v562, %v563
    %v565 = vrot.slane %v564, 1
    %v566 = vadd.f32 %v564, %v565
    %v567 = vadd.f32 %v505, %v506
    %v568 = vadd.f32 %v567, %v507
    %v569 = vadd.f32 %v568, %v508
    %v570 = vrot.slane %v569, 4
    %v571 = vadd.f32 %v569, %v570
    %v572 = vrot.slane %v571, 2
    %v573 = vadd.f32 %v571, %v572
    %v574 = vrot.slane %v573, 1
    %v575 = vadd.f32 %v573, %v574
    %v576 = vadd.f32 %v509, %v510
    %v577 = vadd.f32 %v576, %v511
    %v578 = vadd.f32 %v577, %v512
    %v579 = vrot.slane %v578, 4
    %v580 = vadd.f32 %v578, %v579
    %v581 = vrot.slane %v580, 2
    %v582 = vadd.f32 %v580, %v581
    %v583 = vrot.slane %v582, 1
    %v584 = vadd.f32 %v582, %v583
    %v585 = vxor.u32 %v521, 2147483648
    %v586 = vxor.u32 %v530, 2147483648
    %v587 = vxor.u32 %v539, 2147483648
    %v588 = vxor.u32 %v548, 2147483648
    %v589 = vxor.u32 %v557, 2147483648
    %v590 = vxor.u32 %v566, 2147483648
    %v591 = vxor.u32 %v575, 2147483648
    %v592 = vxor.u32 %v584, 2147483648
    %v593 = vmul.f32 %v585, 1.442695
    %v594 = vpow.pop %v593
    %v595 = vmul.f32 %v586, 1.442695
    %v596 = vpow.pop %v595
    %v597 = vmul.f32 %v587, 1.442695
    %v598 = vpow.pop %v597
    %v599 = vmul.f32 %v588, 1.442695
    %v600 = vpow.pop %v599
    %v601 = vmul.f32 %v589, 1.442695
    %v602 = vpow.pop %v601
    %v603 = vmul.f32 %v590, 1.442695
    %v604 = vpow.pop %v603
    %v605 = vmul.f32 %v591, 1.442695
    %v606 = vpow.pop %v605
    %v607 = vmul.f32 %v592, 1.442695
    %v608 = vpow.pop %v607
    %v609 = vadd.f32 %v594, 1.0
    %v610 = vadd.f32 %v596, 1.0
    %v611 = vadd.f32 %v598, 1.0
    %v612 = vadd.f32 %v600, 1.0
    %v613 = vadd.f32 %v602, 1.0
    %v614 = vadd.f32 %v604, 1.0
    %v615 = vadd.f32 %v606, 1.0
    %v616 = vadd.f32 %v608, 1.0
    %v617 = vrcp.pop %v609
    %v618 = vmul.f32 1.0, %v617
    %v619 = vrcp.pop %v610
    %v620 = vmul.f32 1.0, %v619
    %v621 = vrcp.pop %v611
    %v622 = vmul.f32 1.0, %v621
    %v623 = vrcp.pop %v612
    %v624 = vmul.f32 1.0, %v623
    %v625 = vrcp.pop %v613
    %v626 = vmul.f32 1.0, %v625
    %v627 = vrcp.pop %v614
    %v628 = vmul.f32 1.0, %v627
    %v629 = vrcp.pop %v615
    %v630 = vmul.f32 1.0, %v629
    %v631 = vrcp.pop %v616
    %v632 = vmul.f32 1.0, %v631
    %v633 = vld [vmem:[%s4] sm:$0xff]
    %v634 = vld [vmem:[%s4 + $0x8] sm:$0xff]
    %v635 = vld [vmem:[%s4 + $0x10] sm:$0xff]
    %v636 = vld [vmem:[%s4 + $0x18] sm:$0xff]
    %v637 = vld [vmem:[%s4 + $0x20] sm:$0xff]
    %v638 = vld [vmem:[%s4 + $0x28] sm:$0xff]
    %v639 = vld [vmem:[%s4 + $0x30] sm:$0xff]
    %v640 = vld [vmem:[%s4 + $0x38] sm:$0xff]
    %v641 = vld [vmem:[%s4 + $0x40] sm:$0xff]
    %v642 = vld [vmem:[%s4 + $0x48] sm:$0xff]
    %v643 = vld [vmem:[%s4 + $0x50] sm:$0xff]
    %v644 = vld [vmem:[%s4 + $0x58] sm:$0xff]
    %v645 = vld [vmem:[%s4 + $0x60] sm:$0xff]
    %v646 = vld [vmem:[%s4 + $0x68] sm:$0xff]
    %v647 = vld [vmem:[%s4 + $0x70] sm:$0xff]
    %v648 = vld [vmem:[%s4 + $0x78] sm:$0xff]
    %vm657 = vcmask 1041409
    %v658 = vsel %vm657, %v620, %v618
    %vm659 = vcmask 1042434
    %v660 = vsel %vm659, %v622, %v658
    %vm661 = vcmask 1043459
    %v662 = vsel %vm661, %v624, %v660
    %vm663 = vcmask 1044484
    %v664 = vsel %vm663, %v626, %v662
    %vm665 = vcmask 1045509
    %v666 = vsel %vm665, %v628, %v664
    %vm667 = vcmask 1046534
    %v668 = vsel %vm667, %v630, %v666
    %vm669 = vcmask 1047559
    %v670 = vsel %vm669, %v632, %v668
    %672 = vmatprep.subr.mxu0 0.0
    %673 = vmatpush1.msra.mxu0 %v633
    %674 = vmatprep.subr.mxu0 0.0
    %675 = vmatpush1.msra.mxu0 %v634
    %676 = vmatprep.subr.mxu0 0.0
    %677 = vmatpush1.msra.mxu0 %v635
    %678 = vmatprep.subr.mxu0 0.0
    %679 = vmatpush1.msra.mxu0 %v636
    %680 = vmatprep.subr.mxu0 0.0
    %681 = vmatpush1.msra.mxu0 %v637
    %682 = vmatprep.subr.mxu0 0.0
    %683 = vmatpush1.msra.mxu0 %v638
    %684 = vmatprep.subr.mxu0 0.0
    %685 = vmatpush1.msra.mxu0 %v639
    %686 = vmatprep.subr.mxu0 0.0
    %687 = vmatpush1.msra.mxu0 %v640
    %688 = vmatprep.subr.mxu0 0.0
    %689 = vmatpush1.msra.mxu0 %v641
    %690 = vmatprep.subr.mxu0 0.0
    %691 = vmatpush1.msra.mxu0 %v642
    %692 = vmatprep.subr.mxu0 0.0
    %693 = vmatpush1.msra.mxu0 %v643
    %694 = vmatprep.subr.mxu0 0.0
    %695 = vmatpush1.msra.mxu0 %v644
    %696 = vmatprep.subr.mxu0 0.0
    %697 = vmatpush1.msra.mxu0 %v645
    %698 = vmatprep.subr.mxu0 0.0
    %699 = vmatpush1.msra.mxu0 %v646
    %700 = vmatprep.subr.mxu0 0.0
    %701 = vmatpush1.msra.mxu0 %v647
    %702 = vmatprep.subr.mxu0 0.0
    %703 = vmatpush1.msra.mxu0 %v648
    %704 = vmatprep.subr.mxu0 0.0
    %705 = vmatpush1.msra.mxu0 0.0
    %706 = vmatprep.subr.mxu0 0.0
    %707 = vmatpush1.msra.mxu0 0.0
    %708 = vmatprep.subr.mxu0 0.0
    %709 = vmatpush1.msra.mxu0 0.0
    %710 = vmatprep.subr.mxu0 0.0
    %711 = vmatpush1.msra.mxu0 0.0
    %712 = vmatprep.subr.mxu0 0.0
    %713 = vmatpush1.msra.mxu0 0.0
    %714 = vmatprep.subr.mxu0 0.0
    %715 = vmatpush1.msra.mxu0 0.0
    %716 = vmatprep.subr.mxu0 0.0
    %717 = vmatpush1.msra.mxu0 0.0
    %718 = vmatprep.subr.mxu0 0.0
    %719 = vmatpush1.msra.mxu0 0.0
    %720 = vmatprep.subr.mxu0 0.0
    %721 = vmatpush1.msra.mxu0 0.0
    %722 = vmatprep.subr.mxu0 0.0
    %723 = vmatpush1.msra.mxu0 0.0
    %724 = vmatprep.subr.mxu0 0.0
    %725 = vmatpush1.msra.mxu0 0.0
    %726 = vmatprep.subr.mxu0 0.0
    %727 = vmatpush1.msra.mxu0 0.0
    %728 = vmatprep.subr.mxu0 0.0
    %729 = vmatpush1.msra.mxu0 0.0
    %730 = vmatprep.subr.mxu0 0.0
    %731 = vmatpush1.msra.mxu0 0.0
    %732 = vmatprep.subr.mxu0 0.0
    %733 = vmatpush1.msra.mxu0 0.0
    %734 = vmatprep.subr.mxu0 0.0
    %735 = vmatpush1.msra.mxu0 0.0
    %736 = vmatprep.mubr.f32.mxu0 0.0
    %737 = vmatmul.mubr.f32.gmra.mrb[0].mxu0 %v670
    %v738 = vpop.f32.mrb[0].mxu0
    %v739 = vadd.f32 0.0, %v738
    %v740 = vpop.f32.mrb[0].mxu0
    %741 = vdwg.mxu0
    %p742 = scmp.eq.s32.totalorder 0, 0
    // Predicated region
    $region22: #{_lambda_.1} parent=1 // pred_check
      %p743 = pneg %p742
    $region23: #{_lambda_.1} parent=1 // pred_check_branch
      %745 = sbr.rel (%p743) target = $region25
    $region24: #{_lambda_.1} parent=1 // pred_region
      %746 = vst [vmem:[#allocation2] sm:$0xff] 0.0
    $region25: #{_lambda_.1} parent=1 // pred_fallthru
      _
    %v747 = vld [vmem:[#allocation2] sm:$0xff]
    %v748 = vadd.f32 %v747, %v739
    %749 = vst [vmem:[#allocation2] sm:$0xff] %v748
    // Predicated region
    $region26: #{_lambda_.1} parent=1 // pred_check
      _
    $region27: #{_lambda_.1} parent=1 // pred_check_branch
      %751 = sbr.rel (0) target = $region29
    $region28: #{_lambda_.1} parent=1 // pred_region
      %s753 = ssub.s32 128, 128
      %754 = vsyncadd [#allocation3], %s753
      %s756 = sshll.u32 [#allocation2], 4
      %s757 = int_to_ptr.vmem [resolvable:$true] %s756
      %759 = dma.vmem_to_hbm [thread:$0]  %s757, 128, %s5, [#allocation3]
    $region29: #{_lambda_.1} parent=1 // pred_fallthru
      _
    // Predicated region
    $region30: #{_lambda_.1} parent=1 // pred_check
      _
    $region31: #{_lambda_.1} parent=1 // pred_check_branch
      %761 = sbr.rel (0) target = $region33
    $region32: #{_lambda_.1} parent=1 // pred_region
      %762 = dma.done [#allocation3], 128
    $region33: #{_lambda_.1} parent=1 // pred_fallthru
      _
    %763 = vsyncpa [#allocation3], 1

</llo_original>
